<compile_context>
chip_gen: v7x
topology: tpu7x:2x2x1
jax: 0.10.0
libtpu: 0.0.40
codegen_flags: <defaults>
</compile_context>

<pallas_src>
import functools

import jax
import jax.numpy as jnp
import numpy as np
from jax.experimental import pallas as pl
from jax.experimental.pallas import tpu as pltpu


# --------------------------------------------------------------------------- #
# Kernel
# --------------------------------------------------------------------------- #
def _knnc_kernel(dist_ref, packed_ref, out_ref, *, k: int, compute_dtype):
    # Distance tile in its compute dtype (no-op cast when dtypes already match).
    d = dist_ref[...].astype(compute_dtype)          # (TB, P)
    TB, P = d.shape

    # Resident, precomputed (1, P) row: idx * 65536 + label. Broadcast once
    # (hoisted out of the k loop).
    packed = jnp.broadcast_to(packed_ref[...], (TB, P))   # (TB, P) i32

    inf = jnp.asarray(jnp.inf, dtype=compute_dtype)
    big = jnp.int32(2**31 - 1)   # reduction identity; packed < big since idx <= 32766

    # ---- k-smallest selection (== torch.topk(-distances, k)) --------------
    # Per iteration: 2 cross-lane reductions (min distance, min packed on the
    # tied lanes) + one fused knock-out select (skipped on the last iter).
    labels_of = []                                   # k columns (TB, 1) of labels
    for t in range(k):
        m = jnp.min(d, axis=1, keepdims=True)                            # (TB, 1)
        idx_lab = jnp.min(jnp.where(d == m, packed, big),
                          axis=1, keepdims=True)                         # (TB, 1)
        labels_of.append(jnp.bitwise_and(idx_lab, jnp.int32(0xFFFF)))    # label
        if t + 1 < k:
            # exactly one element per row matches idx_lab -> knock it out
            d = jnp.where(packed == idx_lab, inf, d)

    # ---- mode over the k winning labels (torch.mode: smallest on ties) ----
    if k == 1:
        winner = labels_of[0]
    else:
        sel = jnp.concatenate(labels_of, axis=1)     # (TB, k)
        counts = jnp.zeros_like(sel)
        for j in range(k):
            counts = counts + (sel == sel[:, j:j + 1]).astype(jnp.int32)
        # lexicographic key: maximize count, then minimize label value
        key = counts * 65536 - sel
        best_key = jnp.max(key, axis=1, keepdims=True)
        winner = jnp.min(jnp.where(key == best_key, sel, jnp.int32(2**30)),
                         axis=1, keepdims=True)      # (TB, 1)

    out_ref[...] = winner.astype(jnp.int32)


# --------------------------------------------------------------------------- #
# Tile sizing / per-generation tuning
# --------------------------------------------------------------------------- #
def _round_up(x: int, m: int) -> int:
    return ((x + m - 1) // m) * m


def _tpu_tuning():
    """(block_vmem_budget_bytes, vmem_limit_bytes, native_bf16_compute)."""
    try:
        kind = jax.devices()[0].device_kind.lower()
    except Exception:
        kind = ""
    if "v7" in kind:
        # 64 MiB physical VMEM per TC: keep blocks modest, limit <= 40 MiB.
        return 14 << 20, 40 << 20, True
    if "v6" in kind:
        return 24 << 20, 64 << 20, True
    if any(t in kind for t in ("v5", "v4", "v3", "v2")):
        # 128 MiB physical VMEM but no bf16 VALU -> f32 compute path.
        return 24 << 20, 64 << 20, False
    return 16 << 20, 48 << 20, True


def _pick_block_b(B: int, P: int, in_itemsize: int, compute_itemsize: int,
                  budget: int) -> int:
    """Batch tile size from a per-step VMEM budget: double-buffered input block
    + live compute-dtype distances + packed int32 + headroom for temporaries."""
    per_row = P * (2 * in_itemsize + 3 * compute_itemsize + 4) + 16
    tb = budget // max(per_row, 1)
    tb = max(8, min(int(tb), 2048))
    tb = (tb // 8) * 8
    # Megacore (v7x has 2 TCs): prefer >= 2 grid steps on large batches so the
    # "parallel" batch axis can shard, as long as blocks stay >= 256 rows.
    if B >= 512:
        tb = min(tb, max(256, _round_up((B + 1) // 2, 8)))
    return max(8, tb)


# --------------------------------------------------------------------------- #
# Wrapper
# --------------------------------------------------------------------------- #
def knnc_pallas(distances: jax.Array, labels: jax.Array, k: int = 1,
                *, block_b: int | None = None) -> jax.Array:
    """distances: (B, P) float; labels: (P,) int -> winning labels (B,) int32."""
    B, P = distances.shape
    assert 1 <= k <= P, "require 1 <= k <= P"
    assert P < 32768, "packed index+label trick requires P < 32768"

    # Cheap host-side label-range check when labels are concrete (skipped
    # under tracing). Labels outside [0, 65535] would corrupt the packing.
    try:
        lab_np = np.asarray(labels)
    except Exception:
        lab_np = None
    if lab_np is not None and lab_np.size and (
            int(lab_np.min()) < 0 or int(lab_np.max()) > 0xFFFF):
        raise ValueError("knnc_pallas requires labels in [0, 65535]")

    if distances.dtype not in (jnp.float32, jnp.bfloat16):
        distances = distances.astype(jnp.float32)

    budget, vmem_limit, bf16_native = _tpu_tuning()
    compute_dtype = (jnp.bfloat16
                     if (distances.dtype == jnp.bfloat16 and bf16_native)
                     else jnp.float32)

    # Precomputed resident row: idx * 65536 + label  (i32, (1, P)).
    packed = (jnp.arange(P, dtype=jnp.int32) * 65536
              + labels.astype(jnp.int32)).reshape(1, P)

    if block_b is not None:
        TB = max(8, (int(block_b) // 8) * 8)
    else:
        TB = _pick_block_b(B, P, distances.dtype.itemsize,
                           jnp.dtype(compute_dtype).itemsize, budget)
    TB = min(TB, _round_up(B, 8))          # never larger than (8-padded) batch

    num_blocks = pl.cdiv(B, TB)            # ragged last block; no input padding
    B_out = num_blocks * TB                # padded output rows hold garbage,
                                           # sliced off below

    out = pl.pallas_call(
        functools.partial(_knnc_kernel, k=k, compute_dtype=compute_dtype),
        out_shape=jax.ShapeDtypeStruct((B_out, 1), jnp.int32),
        grid=(num_blocks,),
        in_specs=[
            pl.BlockSpec((TB, P), lambda i: (i, 0)),   # distance tile, pipelined
            pl.BlockSpec((1, P), lambda i: (0, 0)),    # packed labels, resident
        ],
        out_specs=pl.BlockSpec((TB, 1), lambda i: (i, 0)),
        compiler_params=pltpu.CompilerParams(
            dimension_semantics=("parallel",),
            vmem_limit_bytes=vmem_limit,
        ),
    )(distances, packed)                   # NOTE: input in native dtype (no f32 copy)
    return out[:B, 0]


class KNNC:
    """Thin wrapper mirroring the PyTorch KNNC module."""

    def __init__(self, k: int = 1):
        self.k = k

    def __call__(self, distances, labels):
        return knnc_pallas(distances, labels, k=self.k)


# --------------------------------------------------------------------------- #
# Reference + tests
# --------------------------------------------------------------------------- #
def _knnc_reference(distances, labels, k):
    """Pure-numpy reference mirroring knnc + torch.mode tie-break (smallest mode)."""
    d = np.asarray(jnp.asarray(distances, jnp.float32))
    lab = np.asarray(labels)
    B = d.shape[0]
    out = np.zeros((B,), dtype=np.int32)
    for b in range(B):
        idx = np.argsort(d[b], kind="stable")[:k]
        wl = lab[idx]
        vals, cnts = np.unique(wl, return_counts=True)
        modes = vals[cnts == cnts.max()]
        out[b] = modes.min()
    return out


if __name__ == "__main__":
    key = jax.random.PRNGKey(0)
    kd, kl, kd2, kl2 = jax.random.split(key, 4)

    # Test 1: small f32, single grid step, via the module wrapper.
    B, P, K, NUM_CLASSES = 8, 16, 3, 4
    distances = jax.random.uniform(kd, (B, P), dtype=jnp.float32)
    labels = jax.random.randint(kl, (P,), 0, NUM_CLASSES, dtype=jnp.int32)

    comp = KNNC(k=K)
    result = jax.block_until_ready(comp(distances, labels))
    ref = _knnc_reference(distances, labels, K)
    assert result.shape == (B,)
    assert np.array_equal(np.asarray(result), ref), (result, ref)

    # Test 2: bf16 input, B not a multiple of the tile (ragged last block,
    # no input padding), multi-step parallel grid.
    B2, P2, K2 = 300, 128, 5
    distances2 = jax.random.uniform(kd2, (B2, P2), dtype=jnp.float32).astype(jnp.bfloat16)
    labels2 = jax.random.randint(kl2, (P2,), 0, 6, dtype=jnp.int32)

    result2 = jax.block_until_ready(knnc_pallas(distances2, labels2, k=K2, block_b=128))
    ref2 = _knnc_reference(distances2, labels2, K2)
    assert result2.shape == (B2,)
    assert np.array_equal(np.asarray(result2), ref2), (result2, ref2)

    print("KERNEL_OK")
</pallas_src>

<mosaic_0001>
module attributes {stable_mosaic.version = 11 : i64} {
  func.func @_knnc_kernel(%arg0: i32, %arg1: memref<8x16xf32, #tpu.memory_space<vmem>>, %arg2: memref<1x16xi32, #tpu.memory_space<vmem>>, %arg3: memref<8x1xi32, #tpu.memory_space<vmem>>) attributes {dimension_semantics = [#tpu.dimension_semantics<parallel>], iteration_bounds = array<i64: 1>, scalar_prefetch = 0 : i64, scratch_operands = 0 : i64, tpu.core_type = #tpu.core_type<tc>, window_params = [{transform_indices = @transform_0, window_bounds = array<i64: 8, 16>}, {pipeline_mode = #tpu.pipeline_mode<synchronous>, transform_indices = @transform_1, window_bounds = array<i64: 1, 16>}, {transform_indices = @transform_2, window_bounds = array<i64: 8, 1>}]} {
    %c0 = arith.constant 0 : index
    %c0_0 = arith.constant 0 : index
    %0 = vector.load %arg1[%c0, %c0_0] : memref<8x16xf32, #tpu.memory_space<vmem>>, vector<8x16xf32>
    %c0_1 = arith.constant 0 : index
    %c0_2 = arith.constant 0 : index
    %1 = vector.load %arg2[%c0_1, %c0_2] : memref<1x16xi32, #tpu.memory_space<vmem>>, vector<1x16xi32>
    %2 = vector.shape_cast %1 : vector<1x16xi32> to vector<1x16xi32>
    %3 = vector.broadcast %2 : vector<1x16xi32> to vector<8x16xi32>
    %cst = arith.constant dense<0x7F800000> : vector<8xf32>
    %4 = vector.multi_reduction <minimumf>, %0, %cst [1] : vector<8x16xf32> to vector<8xf32>
    %5 = vector.shape_cast %4 : vector<8xf32> to vector<8x1xf32>
    %6 = vector.broadcast %5 : vector<8x1xf32> to vector<8x16xf32>
    %7 = arith.cmpf oeq, %0, %6 : vector<8x16xf32>
    %c2147483647_i32 = arith.constant 2147483647 : i32
    %8 = vector.broadcast %c2147483647_i32 : i32 to vector<8x16xi32>
    %9 = arith.select %7, %3, %8 : vector<8x16xi1>, vector<8x16xi32>
    %cst_3 = arith.constant dense<2147483647> : vector<8xi32>
    %10 = vector.multi_reduction <minsi>, %9, %cst_3 [1] : vector<8x16xi32> to vector<8xi32>
    %11 = vector.shape_cast %10 : vector<8xi32> to vector<8x1xi32>
    %c65535_i32 = arith.constant 65535 : i32
    %12 = vector.broadcast %c65535_i32 : i32 to vector<8x1xi32>
    %13 = arith.andi %11, %12 : vector<8x1xi32>
    %14 = vector.broadcast %11 : vector<8x1xi32> to vector<8x16xi32>
    %15 = arith.cmpi eq, %3, %14 : vector<8x16xi32>
    %cst_4 = arith.constant 0x7F800000 : f32
    %16 = vector.broadcast %cst_4 : f32 to vector<8x16xf32>
    %17 = arith.select %15, %16, %0 : vector<8x16xi1>, vector<8x16xf32>
    %cst_5 = arith.constant dense<0x7F800000> : vector<8xf32>
    %18 = vector.multi_reduction <minimumf>, %17, %cst_5 [1] : vector<8x16xf32> to vector<8xf32>
    %19 = vector.shape_cast %18 : vector<8xf32> to vector<8x1xf32>
    %20 = vector.broadcast %19 : vector<8x1xf32> to vector<8x16xf32>
    %21 = arith.cmpf oeq, %17, %20 : vector<8x16xf32>
    %c2147483647_i32_6 = arith.constant 2147483647 : i32
    %22 = vector.broadcast %c2147483647_i32_6 : i32 to vector<8x16xi32>
    %23 = arith.select %21, %3, %22 : vector<8x16xi1>, vector<8x16xi32>
    %cst_7 = arith.constant dense<2147483647> : vector<8xi32>
    %24 = vector.multi_reduction <minsi>, %23, %cst_7 [1] : vector<8x16xi32> to vector<8xi32>
    %25 = vector.shape_cast %24 : vector<8xi32> to vector<8x1xi32>
    %c65535_i32_8 = arith.constant 65535 : i32
    %26 = vector.broadcast %c65535_i32_8 : i32 to vector<8x1xi32>
    %27 = arith.andi %25, %26 : vector<8x1xi32>
    %28 = vector.broadcast %25 : vector<8x1xi32> to vector<8x16xi32>
    %29 = arith.cmpi eq, %3, %28 : vector<8x16xi32>
    %cst_9 = arith.constant 0x7F800000 : f32
    %30 = vector.broadcast %cst_9 : f32 to vector<8x16xf32>
    %31 = arith.select %29, %30, %17 : vector<8x16xi1>, vector<8x16xf32>
    %cst_10 = arith.constant dense<0x7F800000> : vector<8xf32>
    %32 = vector.multi_reduction <minimumf>, %31, %cst_10 [1] : vector<8x16xf32> to vector<8xf32>
    %33 = vector.shape_cast %32 : vector<8xf32> to vector<8x1xf32>
    %34 = vector.broadcast %33 : vector<8x1xf32> to vector<8x16xf32>
    %35 = arith.cmpf oeq, %31, %34 : vector<8x16xf32>
    %c2147483647_i32_11 = arith.constant 2147483647 : i32
    %36 = vector.broadcast %c2147483647_i32_11 : i32 to vector<8x16xi32>
    %37 = arith.select %35, %3, %36 : vector<8x16xi1>, vector<8x16xi32>
    %cst_12 = arith.constant dense<2147483647> : vector<8xi32>
    %38 = vector.multi_reduction <minsi>, %37, %cst_12 [1] : vector<8x16xi32> to vector<8xi32>
    %39 = vector.shape_cast %38 : vector<8xi32> to vector<8x1xi32>
    %c65535_i32_13 = arith.constant 65535 : i32
    %40 = vector.broadcast %c65535_i32_13 : i32 to vector<8x1xi32>
    %41 = arith.andi %39, %40 : vector<8x1xi32>
    %42 = tpu.concatenate %13, %27, %41 in 1 : vector<8x1xi32>, vector<8x1xi32>, vector<8x1xi32> -> vector<8x3xi32>
    %c0_i32 = arith.constant 0 : i32
    %43 = vector.broadcast %c0_i32 : i32 to vector<8x3xi32>
    %44 = vector.extract_strided_slice %42 {offsets = [0, 0], sizes = [8, 1], strides = [1, 1]} : vector<8x3xi32> to vector<8x1xi32>
    %45 = vector.broadcast %44 : vector<8x1xi32> to vector<8x3xi32>
    %46 = arith.cmpi eq, %42, %45 : vector<8x3xi32>
    %47 = arith.extui %46 : vector<8x3xi1> to vector<8x3xi32>
    %48 = arith.addi %43, %47 : vector<8x3xi32>
    %49 = vector.extract_strided_slice %42 {offsets = [0, 1], sizes = [8, 1], strides = [1, 1]} : vector<8x3xi32> to vector<8x1xi32>
    %50 = vector.broadcast %49 : vector<8x1xi32> to vector<8x3xi32>
    %51 = arith.cmpi eq, %42, %50 : vector<8x3xi32>
    %52 = arith.extui %51 : vector<8x3xi1> to vector<8x3xi32>
    %53 = arith.addi %48, %52 : vector<8x3xi32>
    %54 = vector.extract_strided_slice %42 {offsets = [0, 2], sizes = [8, 1], strides = [1, 1]} : vector<8x3xi32> to vector<8x1xi32>
    %55 = vector.broadcast %54 : vector<8x1xi32> to vector<8x3xi32>
    %56 = arith.cmpi eq, %42, %55 : vector<8x3xi32>
    %57 = arith.extui %56 : vector<8x3xi1> to vector<8x3xi32>
    %58 = arith.addi %53, %57 : vector<8x3xi32>
    %c65536_i32 = arith.constant 65536 : i32
    %59 = vector.broadcast %c65536_i32 : i32 to vector<8x3xi32>
    %60 = arith.muli %58, %59 : vector<8x3xi32>
    %61 = arith.subi %60, %42 : vector<8x3xi32>
    %cst_14 = arith.constant dense<-2147483648> : vector<8xi32>
    %62 = vector.multi_reduction <maxsi>, %61, %cst_14 [1] : vector<8x3xi32> to vector<8xi32>
    %63 = vector.shape_cast %62 : vector<8xi32> to vector<8x1xi32>
    %64 = vector.broadcast %63 : vector<8x1xi32> to vector<8x3xi32>
    %65 = arith.cmpi eq, %61, %64 : vector<8x3xi32>
    %c1073741824_i32 = arith.constant 1073741824 : i32
    %66 = vector.broadcast %c1073741824_i32 : i32 to vector<8x3xi32>
    %67 = arith.select %65, %42, %66 : vector<8x3xi1>, vector<8x3xi32>
    %cst_15 = arith.constant dense<2147483647> : vector<8xi32>
    %68 = vector.multi_reduction <minsi>, %67, %cst_15 [1] : vector<8x3xi32> to vector<8xi32>
    %69 = vector.shape_cast %68 : vector<8xi32> to vector<8x1xi32>
    %c0_16 = arith.constant 0 : index
    %c0_17 = arith.constant 0 : index
    %70 = vector.load %arg3[%c0_16, %c0_17] : memref<8x1xi32, #tpu.memory_space<vmem>>, vector<8x1xi32>
    tpu.vector_store %arg3[%c0_16, %c0_17], %69 {strides = array<i32>} : memref<8x1xi32, #tpu.memory_space<vmem>>, vector<8x1xi32>,
    return
  }
  func.func @transform_0(%arg0: i32) -> (i32, i32) {
    %c0_i32 = arith.constant 0 : i32
    %c0_i32_0 = arith.constant 0 : i32
    return %arg0, %c0_i32 : i32, i32
  }
  func.func @transform_1(%arg0: i32) -> (i32, i32) {
    %c0_i32 = arith.constant 0 : i32
    %c0_i32_0 = arith.constant 0 : i32
    %c0_i32_1 = arith.constant 0 : i32
    return %c0_i32, %c0_i32_0 : i32, i32
  }
  func.func @transform_2(%arg0: i32) -> (i32, i32) {
    %c0_i32 = arith.constant 0 : i32
    %c0_i32_0 = arith.constant 0 : i32
    return %arg0, %c0_i32 : i32, i32
  }
}

</mosaic_0001>

<llo_original>
// kernel: tpu_custom_call.1
$region0: #{tpu_custom_call.1}
  #allocation0 [shape = 'u32[]', space=smem, size = 0x4, offset = 0x4, fixed_abs, tag = 'smem constant byte address 0x4 - core index']
  #allocation1 [shape = 'u32[144,128]{1,0:T(1,128)}', space=vmem, size = 0x12000, scoped, tag = 'internal scratch']
  %s0 = inlined_call_operand.hbm [shape: f32[8,16], index: 0, kind: input, shape index: {}]
  %s1 = inlined_call_operand.vmem [shape: s32[1,16], index: 1, kind: input, shape index: {}]
  %s2 = inlined_call_operand.vmem [shape: s32[8,1], index: 2, kind: output, shape index: {}]
  %s3 = sld [smem:[#allocation0]]
  $region22: #{tpu_custom_call.1} parent=0
    _
  %s5 = ssub.s32 1, %s3
  %s6 = scalar_select 0, %s5, %s3
  $region1: #{tpu_custom_call.1} parent=0
    #allocation2 [shape = 'u8[4096]{0}', space=vmem, size = 0x1000, scoped, tag = 'input window, operand 0, single buffered']
    #allocation3 [shape = 's32[1]{0}', space=sflag, size = 0x4, scoped, tag = 'scoped memory for tpu_custom_call.1']
    %7 = vsyncpa [#allocation3], 0
    // Predicated region
    $region2: #{tpu_custom_call.1} parent=1 // pred_check
      _
    $region3: #{tpu_custom_call.1} parent=1 // pred_check_branch
      %9 = sbr.rel (0) target = $region5
    $region4: #{tpu_custom_call.1} parent=1 // pred_region
      %s11 = ssub.s32 128, 128
      %12 = vsyncadd [#allocation3], %s11
      %s14 = sshll.u32 [#allocation2], 4
      %s15 = int_to_ptr.vmem [resolvable:$true] %s14
      %17 = dma.hbm_to_vmem [thread:$0]  %s0, 128, %s15, [#allocation3]
    $region5: #{tpu_custom_call.1} parent=1 // pred_fallthru
      _
    // Predicated region
    $region6: #{tpu_custom_call.1} parent=1 // pred_check
      _
    $region7: #{tpu_custom_call.1} parent=1 // pred_check_branch
      %19 = sbr.rel (0) target = $region9
    $region8: #{tpu_custom_call.1} parent=1 // pred_region
      _
    $region9: #{tpu_custom_call.1} parent=1 // pred_fallthru
      _
    // Predicated region
    $region10: #{tpu_custom_call.1} parent=1 // pred_check
      _
    $region11: #{tpu_custom_call.1} parent=1 // pred_check_branch
      %21 = sbr.rel (0) target = $region13
    $region12: #{tpu_custom_call.1} parent=1 // pred_region
      %22 = dma.done [#allocation3], 128
    $region13: #{tpu_custom_call.1} parent=1 // pred_fallthru
      _
    %v23 = vld [vmem:[#allocation2] sm:$0xff]
    %v24 = vld [vmem:[%s1] sm:$0x1]
    %v25 = vlaneseq
    %v26 = vshrl.u32 %v25, 7
    %v27 = vsub.s32 0, %v26
    %v28 = vrot.slane %v24, %v27
    %vm29 = vcmask 130048
    %v30 = vsel %vm29, %v23, inf
    %31 = vmin.xlane.f32.xlu0 %v30
    %v32 = vpop.xlane.xlu0 %31
    %vm33 = vcmp.eq.f32.partialorder %v23, %v32
    %v34 = vsel %vm33, %v28, 2147483647
    %v35 = vsel %vm29, %v34, 2147483647
    %v36 = vand.u32 %v35, 65535
    %v37 = vshra.s32 %v35, 16
    %v38 = vcvt.s32.f32 %v36
    %v39 = vcvt.s32.f32 %v37
    %40 = vmin.xlane.f32.xlu0 %v39
    %v41 = vpop.xlane.xlu0 %40
    %vm42 = vcmp.eq.f32.partialorder %v39, %v41
    %v43 = vsel %vm42, %v38, inf
    %44 = vmin.xlane.f32.xlu0 %v43
    %v45 = vpop.xlane.xlu0 %44
    %v46 = vcvt.f32.s32 %v45
    %v47 = vcvt.f32.s32 %v41
    %v48 = vshll.u32 %v47, 16
    %v49 = vadd.s32 %v48, %v46
    %v50 = vand.u32 %v49, 65535
    %vm51 = vcmp.eq.s32.totalorder %v28, %v49
    %v52 = vsel %vm51, inf, %v23
    %v53 = vsel %vm29, %v52, inf
    %54 = vmin.xlane.f32.xlu0 %v53
    %v55 = vpop.xlane.xlu0 %54
    %vm56 = vcmp.eq.f32.partialorder %v52, %v55
    %v57 = vsel %vm56, %v28, 2147483647
    %v58 = vsel %vm29, %v57, 2147483647
    %v59 = vand.u32 %v58, 65535
    %v60 = vshra.s32 %v58, 16
    %v61 = vcvt.s32.f32 %v59
    %v62 = vcvt.s32.f32 %v60
    %63 = vmin.xlane.f32.xlu0 %v62
    %v64 = vpop.xlane.xlu0 %63
    %vm65 = vcmp.eq.f32.partialorder %v62, %v64
    %v66 = vsel %vm65, %v61, inf
    %67 = vmin.xlane.f32.xlu0 %v66
    %v68 = vpop.xlane.xlu0 %67
    %v69 = vcvt.f32.s32 %v68
    %v70 = vcvt.f32.s32 %v64
    %v71 = vshll.u32 %v70, 16
    %v72 = vadd.s32 %v71, %v69
    %v73 = vand.u32 %v72, 65535
    %vm74 = vcmp.eq.s32.totalorder %v28, %v72
    %v75 = vsel %vm74, inf, %v52
    %v76 = vsel %vm29, %v75, inf
    %77 = vmin.xlane.f32.xlu0 %v76
    %v78 = vpop.xlane.xlu0 %77
    %vm79 = vcmp.eq.f32.partialorder %v75, %v78
    %v80 = vsel %vm79, %v28, 2147483647
    %v81 = vsel %vm29, %v80, 2147483647
    %v82 = vand.u32 %v81, 65535
    %v83 = vshra.s32 %v81, 16
    %v84 = vcvt.s32.f32 %v82
    %v85 = vcvt.s32.f32 %v83
    %86 = vmin.xlane.f32.xlu0 %v85
    %v87 = vpop.xlane.xlu0 %86
    %vm88 = vcmp.eq.f32.partialorder %v85, %v87
    %v89 = vsel %vm88, %v84, inf
    %90 = vmin.xlane.f32.xlu0 %v89
    %v91 = vpop.xlane.xlu0 %90
    %v92 = vcvt.f32.s32 %v91
    %v93 = vcvt.f32.s32 %v87
    %v94 = vshll.u32 %v93, 16
    %v95 = vadd.s32 %v94, %v92
    %v96 = vand.u32 %v95, 65535
    %vm97 = vcmask 7168
    %v98 = vsel %vm97, %v50, %v73
    %vm99 = vcmask 15360
    %v100 = vsel %vm99, %v98, %v96
    %101 = vset.pattern.permute.xlu0 0
    %102 = vperm.xlu0 %101, %v100
    %v103 = vpop.permute.xlu0 %102
    %vm104 = vcmp.eq.s32.totalorder %v100, %v103
    %v105 = vsel %vm104, 1, 0
    %106 = vset.pattern.permute.xlu0 1
    %107 = vperm.xlu0 %106, %v100
    %v108 = vpop.permute.xlu0 %107
    %vm109 = vcmp.eq.s32.totalorder %v100, %v108
    %v110 = vsel %vm109, 1, 0
    %v111 = vadd.s32 %v105, %v110
    %112 = vset.pattern.permute.xlu0 2
    %113 = vperm.xlu0 %112, %v100
    %v114 = vpop.permute.xlu0 %113
    %vm115 = vcmp.eq.s32.totalorder %v100, %v114
    %v116 = vsel %vm115, 1, 0
    %v117 = vadd.s32 %v111, %v116
    %v118 = vmul.u32 %v117, 65536
    %v119 = vsub.s32 %v118, %v100
    %vm120 = vcmask 23552
    %v121 = vsel %vm120, %v119, 2147483648
    %v122 = vand.u32 %v121, 65535
    %v123 = vshra.s32 %v121, 16
    %v124 = vcvt.s32.f32 %v122
    %v125 = vcvt.s32.f32 %v123
    %126 = vmax.xlane.f32.xlu0 %v125
    %v127 = vpop.xlane.xlu0 %126
    %vm128 = vcmp.eq.f32.partialorder %v125, %v127
    %v129 = vsel %vm128, %v124, -inf
    %130 = vmax.xlane.f32.xlu0 %v129
    %v131 = vpop.xlane.xlu0 %130
    %v132 = vcvt.f32.s32 %v131
    %v133 = vcvt.f32.s32 %v127
    %v134 = vshll.u32 %v133, 16
    %v135 = vadd.s32 %v134, %v132
    %vm136 = vcmp.eq.s32.totalorder %v119, %v135
    %v137 = vsel %vm136, %v100, 1073741824
    %v138 = vsel %vm120, %v137, 2147483647
    %v139 = vand.u32 %v138, 65535
    %v140 = vshra.s32 %v138, 16
    %v141 = vcvt.s32.f32 %v139
    %v142 = vcvt.s32.f32 %v140
    %143 = vmin.xlane.f32.xlu0 %v142
    %v144 = vpop.xlane.xlu0 %143
    %vm145 = vcmp.eq.f32.partialorder %v142, %v144
    %v146 = vsel %vm145, %v141, inf
    %147 = vmin.xlane.f32.xlu0 %v146
    %v148 = vpop.xlane.xlu0 %147
    %v149 = vcvt.f32.s32 %v148
    %v150 = vcvt.f32.s32 %v144
    %v151 = vshll.u32 %v150, 16
    %v152 = vadd.s32 %v151, %v149
    %153 = vst.msk [vmem:[%s2] sm:$0xff] %vm97, %v152
    // Predicated region
    $region14: #{tpu_custom_call.1} parent=1 // pred_check
      _
    $region15: #{tpu_custom_call.1} parent=1 // pred_check_branch
      %155 = sbr.rel (0) target = $region17
    $region16: #{tpu_custom_call.1} parent=1 // pred_region
      _
    $region17: #{tpu_custom_call.1} parent=1 // pred_fallthru
      _
    // Predicated region
    $region18: #{tpu_custom_call.1} parent=1 // pred_check
      _
    $region19: #{tpu_custom_call.1} parent=1 // pred_check_branch
      %157 = sbr.rel (0) target = $region21
    $region20: #{tpu_custom_call.1} parent=1 // pred_region
      _
    $region21: #{tpu_custom_call.1} parent=1 // pred_fallthru
      _
    %158 = vsyncpa [#allocation3], 1

</llo_original>
